<compile_context>
chip_gen: v7x
topology: tpu7x:2x2x1
jax: 0.10.0
libtpu: 0.0.40
codegen_flags: <defaults>
</compile_context>

<pallas_src>
import functools

import jax
import jax.numpy as jnp
from jax.experimental import pallas as pl
from jax.experimental.pallas import tpu as pltpu


_FUSED_MAX_N = 4096   # single-block path threshold (activations ~ 32*N*4 B in VMEM)
_TILE_M_CAP = 2048    # lane-tile cap for the tiled path


def _round_up(v: int, m: int) -> int:
    return (v + m - 1) // m * m


def _make_kernel(*, n_hidden, f_in, f_out, chunk, fused_n=None):
    """Kernel for one (f_out, T) output tile; the batch sits on the LANE axis.

    x_ref : (f_in, T) input tile
    w_ref : (n_hidden+1, H, K) zero-padded weight slab (PyTorch (out,in) layout)
    b_ref : (n_hidden+1, H, 1) zero-padded bias slab
    If `fused_n` is not None, the global mean / unbiased std is computed
    in-kernel (single-block path); otherwise the wrapper folded it into
    layer 0's weights/bias.
    """

    def kernel(x_ref, w_ref, b_ref, out_ref):
        x = x_ref[...]                                   # (f_in, T) f32
        t = x.shape[1]

        if fused_n is not None:
            # Global scalar mean / unbiased std over the n*f_in real elements.
            count = float(fused_n * f_in)
            mean = jnp.sum(x) / count                    # padded lanes are zero
            lane = jax.lax.broadcasted_iota(jnp.int32, x.shape, 1)
            diff = jnp.where(lane < fused_n, x - mean, 0.0)
            var = jnp.sum(diff * diff) / (count - 1.0)
            x = (x - mean) * jax.lax.rsqrt(var)
        # (tiled path: normalization already folded into W0 / b0)

        a = x
        if n_hidden >= 1:
            # First hidden layer: contraction depth f_in (=2) -> VPU broadcast
            # FMAs instead of a nearly-empty MXU pass.
            w0 = w_ref[0]                                # (H, K)
            z = b_ref[0]                                 # (H, 1)
            for f in range(f_in):                        # tiny static unroll
                z = z + w0[:, f:f + 1] * a[f:f + 1, :]
            a = jnp.maximum(z, 0.01 * z)                 # LeakyReLU(0.01)

        # Middle hidden layers (all but the last): H x H dots on the MXU.
        for i in range(1, n_hidden - 1):
            z = jnp.dot(w_ref[i], a,
                        preferred_element_type=jnp.float32) + b_ref[i]
            a = jnp.maximum(z, 0.01 * z)

        # Final stage, chunked over lanes so the EUP tanh of chunk c overlaps
        # the MXU work of chunk c+1.
        last_hidden = n_hidden - 1
        w_out = w_ref[n_hidden, :f_out, :]               # (f_out, H)
        b_out = b_ref[n_hidden, :f_out, :]               # (f_out, 1)
        if n_hidden >= 2:
            w_lh = w_ref[last_hidden]                    # (H, H)
            b_lh = b_ref[last_hidden]                    # (H, 1)
        for c in range(0, t, chunk):
            ac = a[:, c:c + chunk]
            if n_hidden >= 2:
                zc = jnp.dot(w_lh, ac,
                             preferred_element_type=jnp.float32) + b_lh
                ac = jnp.maximum(zc, 0.01 * zc)
            tc = jnp.tanh(ac)                            # EUP
            oc = jnp.dot(w_out, tc,
                         preferred_element_type=jnp.float32) + b_out
            out_ref[:, c:c + chunk] = oc.astype(out_ref.dtype)

    return kernel


@functools.partial(jax.jit, static_argnames=("n_hidden", "fused", "tile_m"))
def _forward_impl(x, *flat, n_hidden, fused, tile_m):
    x32 = x.astype(jnp.float32)
    n, f_in = x32.shape
    ws = list(flat[0::2])        # weights, PyTorch (out, in) layout
    bs = list(flat[1::2])        # biases (out,)
    f_out = ws[-1].shape[0]

    if not fused:
        # Fold the global normalization into layer 0 (exact affine rewrite):
        #   W0' = inv_std * W0 ;  b0' = b0 - mean*inv_std*W0.sum(axis=1)
        mean = jnp.mean(x32)
        var = jnp.sum((x32 - mean) ** 2) / (x32.size - 1)   # unbiased (torch.std)
        inv_std = jax.lax.rsqrt(var)
        if n_hidden >= 1:
            bs[0] = bs[0] - mean * inv_std * jnp.sum(ws[0], axis=1)
            ws[0] = ws[0] * inv_std
        else:
            x32 = (x32 - mean) * inv_std

    # Pack all resident parameters into two zero-padded slabs.
    h_max = max(w.shape[0] for w in ws)
    k_max = max(w.shape[1] for w in ws)
    w_slab = jnp.stack(
        [jnp.pad(w, ((0, h_max - w.shape[0]), (0, k_max - w.shape[1])))
         for w in ws])                                       # (L, H, K)
    b_slab = jnp.stack(
        [jnp.pad(b, (0, h_max - b.shape[0]))[:, None] for b in bs])  # (L, H, 1)

    # Batch on the lane axis; zero-pad to the tile size.
    # TODO(synk): a training step that keeps collocation points feature-major
    # ((2, N)) end-to-end would avoid this transpose/pad relayout entirely.
    n_pad = _round_up(n, tile_m)
    xt = jnp.pad(x32.T, ((0, 0), (0, n_pad - n)))            # (f_in, n_pad)
    grid = (n_pad // tile_m,)

    # Chunk width for the tanh/MXU interleave of the final stage.
    chunk = tile_m
    for c in (512, 256):
        if tile_m > c and tile_m % c == 0:
            chunk = c
            break

    kernel = _make_kernel(n_hidden=n_hidden, f_in=f_in, f_out=f_out,
                          chunk=chunk, fused_n=(n if fused else None))
    resident = lambda i: (0, 0, 0)                           # weights stay put

    out = pl.pallas_call(
        kernel,
        out_shape=jax.ShapeDtypeStruct((f_out, n_pad), jnp.float32),
        grid=grid,
        in_specs=[pl.BlockSpec((f_in, tile_m), lambda i: (0, i)),
                  pl.BlockSpec(w_slab.shape, resident),
                  pl.BlockSpec(b_slab.shape, resident)],
        out_specs=pl.BlockSpec((f_out, tile_m), lambda i: (0, i)),
        compiler_params=pltpu.CompilerParams(
            dimension_semantics=("parallel",)),
    )(xt, w_slab, b_slab)

    return out[:, :n].T                                      # back to (N, F_out)


def rankine_oval_forward(x, params, layers, force_path=None):
    """params: list of (W (out,in), b (out,)) for ALL len(layers)-1 linears
    (PyTorch nn.Linear layout). Only linears[0..L-4] and linears[-1] are used;
    linears[L-3] is dead in the reference forward and is not passed."""
    n_hidden = len(layers) - 3
    used = list(params[:n_hidden]) + [params[-1]]
    flat = []
    for w, b in used:
        flat.append(jnp.asarray(w, jnp.float32))
        flat.append(jnp.asarray(b, jnp.float32))
    n = int(x.shape[0])

    if force_path is None:
        fused = n <= _FUSED_MAX_N
    else:
        fused = (force_path == "fused")

    if fused:
        tile_m = _round_up(max(n, 1), 128)                   # one block, grid=(1,)
    else:
        # >=4 grid steps (>=2 per v7x TensorCore), tiles up to _TILE_M_CAP lanes.
        tile_m = min(_TILE_M_CAP, max(128, _round_up(-(-n // 4), 128)))
    return _forward_impl(x, *flat, n_hidden=n_hidden, fused=fused, tile_m=tile_m)


def init_params(key, layers):
    """PyTorch-style nn.Linear init: U(-1/sqrt(fan_in), +1/sqrt(fan_in));
    weights in (out, in) layout, biases (out,)."""
    params = []
    for i in range(len(layers) - 1):
        fan_in, fan_out = layers[i], layers[i + 1]
        key, kw, kb = jax.random.split(key, 3)
        bound = 1.0 / float(fan_in) ** 0.5
        w = jax.random.uniform(kw, (fan_out, fan_in), jnp.float32, -bound, bound)
        b = jax.random.uniform(kb, (fan_out,), jnp.float32, -bound, bound)
        params.append((w, b))
    return params


def _reference_forward(x, params, layers):
    """Pure-JAX mirror of the PyTorch forward (high-precision dots)."""
    hi = jax.lax.Precision.HIGHEST
    x = x.astype(jnp.float32)
    mean = jnp.mean(x)
    std = jnp.sqrt(jnp.sum((x - mean) ** 2) / (x.size - 1))
    a = (x - mean) / std
    for i in range(len(layers) - 3):
        w, b = params[i]
        z = jnp.dot(a, w.T, precision=hi) + b
        a = jnp.where(z > 0, z, 0.01 * z)
    a = jnp.tanh(a)
    w, b = params[-1]
    return jnp.dot(a, w.T, precision=hi) + b


if __name__ == "__main__":
    # 2-D coordinates in, 2-D velocity out, hidden width 32 (PINN-typical).
    layers = [2, 32, 32, 32, 2]
    key = jax.random.PRNGKey(0)
    key_p, key_a, key_b = jax.random.split(key, 3)
    params = init_params(key_p, layers)

    # Small batch -> fused single-block path (in-kernel mean/std, grid=(1,)).
    Xa = jax.random.normal(key_a, (8, layers[0]), jnp.float32)
    out_a = jax.block_until_ready(rankine_oval_forward(Xa, params, layers))
    ref_a = _reference_forward(Xa, params, layers)
    assert out_a.shape == (8, layers[-1])
    err_a = float(jnp.max(jnp.abs(out_a - ref_a)))
    assert jnp.allclose(out_a, ref_a, atol=2e-4, rtol=2e-4), ("fused mismatch", err_a)

    # Larger batch forced through the tiled multi-step path
    # (folded normalization, resident weight slab, >=4 grid steps).
    Xb = jax.random.normal(key_b, (3000, layers[0]), jnp.float32)
    out_b = jax.block_until_ready(
        rankine_oval_forward(Xb, params, layers, force_path="tiled"))
    ref_b = _reference_forward(Xb, params, layers)
    assert out_b.shape == (3000, layers[-1])
    err_b = float(jnp.max(jnp.abs(out_b - ref_b)))
    assert jnp.allclose(out_b, ref_b, atol=2e-4, rtol=2e-4), ("tiled mismatch", err_b)

    # TODO(synk): laplace_potential / loss / closure use torch.autograd VJPs
    # (training path), which are outside the forward-pass kernel scope.
    print("KERNEL_OK")
</pallas_src>

<mosaic_0001>
module attributes {stable_mosaic.version = 11 : i64} {
  func.func @kernel(%arg0: i32, %arg1: memref<2x128xf32, #tpu.memory_space<vmem>>, %arg2: memref<3x32x32xf32, #tpu.memory_space<vmem>>, %arg3: memref<3x32x1xf32, #tpu.memory_space<vmem>>, %arg4: memref<2x128xf32, #tpu.memory_space<vmem>>) attributes {dimension_semantics = [#tpu.dimension_semantics<parallel>], iteration_bounds = array<i64: 1>, scalar_prefetch = 0 : i64, scratch_operands = 0 : i64, tpu.core_type = #tpu.core_type<tc>, window_params = [{transform_indices = @transform_0, window_bounds = array<i64: 2, 128>}, {pipeline_mode = #tpu.pipeline_mode<synchronous>, transform_indices = @transform_1, window_bounds = array<i64: 3, 32, 32>}, {pipeline_mode = #tpu.pipeline_mode<synchronous>, transform_indices = @transform_2, window_bounds = array<i64: 3, 32, 1>}, {transform_indices = @transform_3, window_bounds = array<i64: 2, 128>}]} {
    %c0 = arith.constant 0 : index
    %c0_0 = arith.constant 0 : index
    %0 = vector.load %arg1[%c0, %c0_0] : memref<2x128xf32, #tpu.memory_space<vmem>>, vector<2x128xf32>
    %1 = vector.shape_cast %0 : vector<2x128xf32> to vector<1x2x128xf32>
    %cst = arith.constant dense<0.000000e+00> : vector<1xf32>
    %2 = vector.multi_reduction <add>, %1, %cst [1, 2] : vector<1x2x128xf32> to vector<1xf32>
    %3 = vector.shape_cast %2 : vector<1xf32> to vector<1x1x1xf32>
    %4 = vector.extract %3[0, 0, 0] : f32 from vector<1x1x1xf32>
    %cst_1 = arith.constant 1.600000e+01 : f32
    %5 = arith.divf %4, %cst_1 : f32
    %6 = tpu.iota {dimensions = array<i32: 1>} : vector<2x128xi32>
    %c8_i32 = arith.constant 8 : i32
    %7 = vector.broadcast %c8_i32 : i32 to vector<2x128xi32>
    %8 = arith.cmpi slt, %6, %7 : vector<2x128xi32>
    %9 = vector.broadcast %5 : f32 to vector<2x128xf32>
    %10 = arith.subf %0, %9 : vector<2x128xf32>
    %cst_2 = arith.constant 0.000000e+00 : f32
    %11 = vector.broadcast %cst_2 : f32 to vector<2x128xf32>
    %12 = arith.select %8, %10, %11 : vector<2x128xi1>, vector<2x128xf32>
    %13 = arith.mulf %12, %12 : vector<2x128xf32>
    %14 = vector.shape_cast %13 : vector<2x128xf32> to vector<1x2x128xf32>
    %cst_3 = arith.constant dense<0.000000e+00> : vector<1xf32>
    %15 = vector.multi_reduction <add>, %14, %cst_3 [1, 2] : vector<1x2x128xf32> to vector<1xf32>
    %16 = vector.shape_cast %15 : vector<1xf32> to vector<1x1x1xf32>
    %17 = vector.extract %16[0, 0, 0] : f32 from vector<1x1x1xf32>
    %cst_4 = arith.constant 1.500000e+01 : f32
    %18 = arith.divf %17, %cst_4 : f32
    %19 = vector.broadcast %5 : f32 to vector<2x128xf32>
    %20 = arith.subf %0, %19 : vector<2x128xf32>
    %21 = math.rsqrt %18 : f32
    %22 = vector.broadcast %21 : f32 to vector<2x128xf32>
    %23 = arith.mulf %20, %22 : vector<2x128xf32>
    %c0_5 = arith.constant 0 : index
    %c0_6 = arith.constant 0 : index
    %c0_7 = arith.constant 0 : index
    %24 = vector.load %arg2[%c0_5, %c0_6, %c0_7] : memref<3x32x32xf32, #tpu.memory_space<vmem>>, vector<1x32x32xf32>
    %25 = vector.shape_cast %24 : vector<1x32x32xf32> to vector<32x32xf32>
    %c0_8 = arith.constant 0 : index
    %c0_9 = arith.constant 0 : index
    %c0_10 = arith.constant 0 : index
    %26 = vector.load %arg3[%c0_8, %c0_9, %c0_10] : memref<3x32x1xf32, #tpu.memory_space<vmem>>, vector<1x32x1xf32>
    %27 = vector.shape_cast %26 : vector<1x32x1xf32> to vector<32x1xf32>
    %28 = vector.extract_strided_slice %25 {offsets = [0, 0], sizes = [32, 1], strides = [1, 1]} : vector<32x32xf32> to vector<32x1xf32>
    %29 = vector.extract_strided_slice %23 {offsets = [0, 0], sizes = [1, 128], strides = [1, 1]} : vector<2x128xf32> to vector<1x128xf32>
    %30 = vector.broadcast %28 : vector<32x1xf32> to vector<32x128xf32>
    %31 = vector.broadcast %29 : vector<1x128xf32> to vector<32x128xf32>
    %32 = arith.mulf %30, %31 : vector<32x128xf32>
    %33 = vector.broadcast %27 : vector<32x1xf32> to vector<32x128xf32>
    %34 = arith.addf %33, %32 : vector<32x128xf32>
    %35 = vector.extract_strided_slice %25 {offsets = [0, 1], sizes = [32, 1], strides = [1, 1]} : vector<32x32xf32> to vector<32x1xf32>
    %36 = vector.extract_strided_slice %23 {offsets = [1, 0], sizes = [1, 128], strides = [1, 1]} : vector<2x128xf32> to vector<1x128xf32>
    %37 = vector.broadcast %35 : vector<32x1xf32> to vector<32x128xf32>
    %38 = vector.broadcast %36 : vector<1x128xf32> to vector<32x128xf32>
    %39 = arith.mulf %37, %38 : vector<32x128xf32>
    %40 = arith.addf %34, %39 : vector<32x128xf32>
    %cst_11 = arith.constant 0.00999999977 : f32
    %41 = vector.broadcast %cst_11 : f32 to vector<32x128xf32>
    %42 = arith.mulf %41, %40 : vector<32x128xf32>
    %43 = arith.maximumf %40, %42 : vector<32x128xf32>
    %c2 = arith.constant 2 : index
    %c0_12 = arith.constant 0 : index
    %c0_13 = arith.constant 0 : index
    %44 = vector.load %arg2[%c2, %c0_12, %c0_13] : memref<3x32x32xf32, #tpu.memory_space<vmem>>, vector<1x2x32xf32>
    %45 = vector.shape_cast %44 : vector<1x2x32xf32> to vector<2x32xf32>
    %c2_14 = arith.constant 2 : index
    %c0_15 = arith.constant 0 : index
    %c0_16 = arith.constant 0 : index
    %46 = vector.load %arg3[%c2_14, %c0_15, %c0_16] : memref<3x32x1xf32, #tpu.memory_space<vmem>>, vector<1x2x1xf32>
    %47 = vector.shape_cast %46 : vector<1x2x1xf32> to vector<2x1xf32>
    %c1 = arith.constant 1 : index
    %c0_17 = arith.constant 0 : index
    %c0_18 = arith.constant 0 : index
    %48 = vector.load %arg2[%c1, %c0_17, %c0_18] : memref<3x32x32xf32, #tpu.memory_space<vmem>>, vector<1x32x32xf32>
    %49 = vector.shape_cast %48 : vector<1x32x32xf32> to vector<32x32xf32>
    %c1_19 = arith.constant 1 : index
    %c0_20 = arith.constant 0 : index
    %c0_21 = arith.constant 0 : index
    %50 = vector.load %arg3[%c1_19, %c0_20, %c0_21] : memref<3x32x1xf32, #tpu.memory_space<vmem>>, vector<1x32x1xf32>
    %51 = vector.shape_cast %50 : vector<1x32x1xf32> to vector<32x1xf32>
    %cst_22 = arith.constant dense<0.000000e+00> : vector<32x128xf32>
    %52 = tpu.matmul %49, %43, %cst_22 {dimension_numbers = #tpu.dot_dimension_numbers<[1], [0], [0], [1], [0, 0, 1, 1], [], []>} : vector<32x32xf32>, vector<32x128xf32>, vector<32x128xf32> -> vector<32x128xf32>
    %53 = vector.broadcast %51 : vector<32x1xf32> to vector<32x128xf32>
    %54 = arith.addf %52, %53 : vector<32x128xf32>
    %cst_23 = arith.constant 0.00999999977 : f32
    %55 = vector.broadcast %cst_23 : f32 to vector<32x128xf32>
    %56 = arith.mulf %55, %54 : vector<32x128xf32>
    %57 = arith.maximumf %54, %56 : vector<32x128xf32>
    %58 = math.tanh %57 : vector<32x128xf32>
    %cst_24 = arith.constant dense<0.000000e+00> : vector<2x128xf32>
    %59 = tpu.matmul %45, %58, %cst_24 {dimension_numbers = #tpu.dot_dimension_numbers<[1], [0], [0], [1], [0, 0, 1, 1], [], []>} : vector<2x32xf32>, vector<32x128xf32>, vector<2x128xf32> -> vector<2x128xf32>
    %60 = vector.broadcast %47 : vector<2x1xf32> to vector<2x128xf32>
    %61 = arith.addf %59, %60 : vector<2x128xf32>
    %c0_25 = arith.constant 0 : index
    %c0_26 = arith.constant 0 : index
    %62 = vector.load %arg4[%c0_25, %c0_26] : memref<2x128xf32, #tpu.memory_space<vmem>>, vector<2x128xf32>
    tpu.vector_store %arg4[%c0_25, %c0_26], %61 {strides = array<i32>} : memref<2x128xf32, #tpu.memory_space<vmem>>, vector<2x128xf32>,
    return
  }
  func.func @transform_0(%arg0: i32) -> (i32, i32) {
    %c0_i32 = arith.constant 0 : i32
    %c0_i32_0 = arith.constant 0 : i32
    return %c0_i32, %arg0 : i32, i32
  }
  func.func @transform_1(%arg0: i32) -> (i32, i32, i32) {
    %c0_i32 = arith.constant 0 : i32
    %c0_i32_0 = arith.constant 0 : i32
    %c0_i32_1 = arith.constant 0 : i32
    %c0_i32_2 = arith.constant 0 : i32
    return %c0_i32, %c0_i32_0, %c0_i32_1 : i32, i32, i32
  }
  func.func @transform_2(%arg0: i32) -> (i32, i32, i32) {
    %c0_i32 = arith.constant 0 : i32
    %c0_i32_0 = arith.constant 0 : i32
    %c0_i32_1 = arith.constant 0 : i32
    %c0_i32_2 = arith.constant 0 : i32
    return %c0_i32, %c0_i32_0, %c0_i32_1 : i32, i32, i32
  }
  func.func @transform_3(%arg0: i32) -> (i32, i32) {
    %c0_i32 = arith.constant 0 : i32
    %c0_i32_0 = arith.constant 0 : i32
    return %c0_i32, %arg0 : i32, i32
  }
}

</mosaic_0001>

<llo_original>
// kernel: _forward_impl.1
$region0: #{_forward_impl.1}
  #allocation0 [shape = 'u32[]', space=smem, size = 0x4, offset = 0x4, fixed_abs, tag = 'smem constant byte address 0x4 - core index']
  #allocation1 [shape = 'u32[144,128]{1,0:T(1,128)}', space=vmem, size = 0x12000, scoped, tag = 'internal scratch']
  %s0 = inlined_call_operand.vmem [shape: f32[2,128], index: 0, kind: input, shape index: {}]
  %s1 = inlined_call_operand.vmem [shape: f32[3,32,32], index: 1, kind: input, shape index: {}]
  %s2 = inlined_call_operand.vmem [shape: f32[3,32,1], index: 2, kind: input, shape index: {}]
  %s3 = inlined_call_operand.vmem [shape: f32[2,128], index: 3, kind: output, shape index: {}]
  %s4 = sld [smem:[#allocation0]]
  $region22: #{_forward_impl.1} parent=0
    _
  %s6 = ssub.s32 1, %s4
  %s7 = scalar_select 0, %s6, %s4
  // Predicated region
  $region2: #{_forward_impl.1} parent=0 // pred_check
    _
  $region3: #{_forward_impl.1} parent=0 // pred_check_branch
    %9 = sbr.rel (0) target = $region5
  $region4: #{_forward_impl.1} parent=0 // pred_region
    _
  $region5: #{_forward_impl.1} parent=0 // pred_fallthru
    _
  // Predicated region
  $region6: #{_forward_impl.1} parent=0 // pred_check
    _
  $region7: #{_forward_impl.1} parent=0 // pred_check_branch
    %11 = sbr.rel (0) target = $region9
  $region8: #{_forward_impl.1} parent=0 // pred_region
    _
  $region9: #{_forward_impl.1} parent=0 // pred_fallthru
    _
  // Predicated region
  $region10: #{_forward_impl.1} parent=0 // pred_check
    _
  $region11: #{_forward_impl.1} parent=0 // pred_check_branch
    %13 = sbr.rel (0) target = $region13
  $region12: #{_forward_impl.1} parent=0 // pred_region
    _
  $region13: #{_forward_impl.1} parent=0 // pred_fallthru
    _
  %v14 = vld [vmem:[%s0] sm:$0x3]
  %vm15 = vcmask 1041408
  %v16 = vsel %vm15, %v14, 0.0
  %17 = vadd.xlane.f32.xlu0 %v16
  %v18 = vpop.xlane.xlu0 %17
  %v19 = vrot.slane %v18, 4
  %v20 = vadd.f32 %v18, %v19
  %v21 = vrot.slane %v20, 2
  %v22 = vadd.f32 %v20, %v21
  %v23 = vrot.slane %v22, 1
  %v24 = vadd.f32 %v22, %v23
  %s25 = vtos %v24
  %v26 = vrcp.pop 16.0
  %s27 = vtos %v26
  %s28 = smul.f32 %s25, %s27
  %v29 = vlaneseq
  %v30 = vand.u32 %v29, 127
  %vm31 = vcmp.lt.s32.totalorder %v30, 8
  %v32 = vstv %s28
  %v33 = vsub.f32 %v14, %v32
  %v34 = vsel %vm31, %v33, 0.0
  %v35 = vmul.f32 %v34, %v34
  %v36 = vsel %vm15, %v35, 0.0
  %37 = vadd.xlane.f32.xlu0 %v36
  %v38 = vpop.xlane.xlu0 %37
  %v39 = vrot.slane %v38, 4
  %v40 = vadd.f32 %v38, %v39
  %v41 = vrot.slane %v40, 2
  %v42 = vadd.f32 %v40, %v41
  %v43 = vrot.slane %v42, 1
  %v44 = vadd.f32 %v42, %v43
  %s45 = vtos %v44
  %v46 = vrcp.pop 15.0
  %s47 = vtos %v46
  %s48 = smul.f32 %s45, %s47
  %v49 = vstv %s48
  %v50 = vrsqrt.pop %v49
  %s51 = vtos %v50
  %v52 = vstv %s51
  %v53 = vmul.f32 %v33, %v52
  %v54 = vld [vmem:[%s1] sm:$0xff]
  %v55 = vld [vmem:[%s1 + $0x8] sm:$0xff]
  %v56 = vld [vmem:[%s1 + $0x10] sm:$0xff]
  %v57 = vld [vmem:[%s1 + $0x18] sm:$0xff]
  %v58 = vld [vmem:[%s2] sm:$0xff]
  %v59 = vld [vmem:[%s2 + $0x8] sm:$0xff]
  %v60 = vld [vmem:[%s2 + $0x10] sm:$0xff]
  %v61 = vld [vmem:[%s2 + $0x18] sm:$0xff]
  %63 = vset.pattern.permute.xlu0 0
  %64 = vperm.xlu0 %63, %v54
  %v65 = vpop.permute.xlu0 %64
  %68 = vset.pattern.permute.xlu0 0
  %69 = vperm.xlu0 %68, %v55
  %v70 = vpop.permute.xlu0 %69
  %73 = vset.pattern.permute.xlu0 0
  %74 = vperm.xlu0 %73, %v56
  %v75 = vpop.permute.xlu0 %74
  %78 = vset.pattern.permute.xlu0 0
  %79 = vperm.xlu0 %78, %v57
  %v80 = vpop.permute.xlu0 %79
  %v82 = vlaneseq
  %v83 = vshrl.u32 %v82, 7
  %v84 = vsub.s32 0, %v83
  %v85 = vrot.slane %v53, %v84
  %v86 = vmul.f32 %v65, %v85
  %v87 = vmul.f32 %v70, %v85
  %v88 = vmul.f32 %v75, %v85
  %v89 = vmul.f32 %v80, %v85
  %91 = vset.pattern.permute.xlu0 0
  %92 = vperm.xlu0 %91, %v58
  %v93 = vpop.permute.xlu0 %92
  %96 = vset.pattern.permute.xlu0 0
  %97 = vperm.xlu0 %96, %v59
  %v98 = vpop.permute.xlu0 %97
  %101 = vset.pattern.permute.xlu0 0
  %102 = vperm.xlu0 %101, %v60
  %v103 = vpop.permute.xlu0 %102
  %106 = vset.pattern.permute.xlu0 0
  %107 = vperm.xlu0 %106, %v61
  %v108 = vpop.permute.xlu0 %107
  %v110 = vadd.f32 %v93, %v86
  %v111 = vadd.f32 %v98, %v87
  %v112 = vadd.f32 %v103, %v88
  %v113 = vadd.f32 %v108, %v89
  %114 = vset.pattern.permute.xlu0 1
  %115 = vperm.xlu0 %114, %v54
  %v116 = vpop.permute.xlu0 %115
  %118 = vset.pattern.permute.xlu0 1
  %119 = vperm.xlu0 %118, %v55
  %v120 = vpop.permute.xlu0 %119
  %122 = vset.pattern.permute.xlu0 1
  %123 = vperm.xlu0 %122, %v56
  %v124 = vpop.permute.xlu0 %123
  %126 = vset.pattern.permute.xlu0 1
  %127 = vperm.xlu0 %126, %v57
  %v128 = vpop.permute.xlu0 %127
  %v130 = vlaneseq
  %v131 = vshrl.u32 %v130, 7
  %v132 = vsub.s32 1, %v131
  %v133 = vrot.slane %v53, %v132
  %v134 = vmul.f32 %v116, %v133
  %v135 = vmul.f32 %v120, %v133
  %v136 = vmul.f32 %v124, %v133
  %v137 = vmul.f32 %v128, %v133
  %v138 = vadd.f32 %v110, %v134
  %v139 = vadd.f32 %v111, %v135
  %v140 = vadd.f32 %v112, %v136
  %v141 = vadd.f32 %v113, %v137
  %v142 = vmul.f32 %v138, 0.01
  %v143 = vmul.f32 %v139, 0.01
  %v144 = vmul.f32 %v140, 0.01
  %v145 = vmul.f32 %v141, 0.01
  %v146 = vmax.f32 %v138, %v142
  %v147 = vmax.f32 %v139, %v143
  %v148 = vmax.f32 %v140, %v144
  %v149 = vmax.f32 %v141, %v145
  %s150 = scalar_lea.vmem %s1, 64
  %v151 = vld [vmem:[%s150] sm:$0x3]
  %s152 = scalar_lea.vmem %s2, 64
  %v153 = vld [vmem:[%s152] sm:$0x3]
  %s154 = scalar_lea.vmem %s1, 32
  %v155 = vld [vmem:[%s154] sm:$0xff]
  %v156 = vld [vmem:[%s154 + $0x8] sm:$0xff]
  %v157 = vld [vmem:[%s154 + $0x10] sm:$0xff]
  %v158 = vld [vmem:[%s154 + $0x18] sm:$0xff]
  %s159 = scalar_lea.vmem %s2, 32
  %v160 = vld [vmem:[%s159] sm:$0xff]
  %v161 = vld [vmem:[%s159 + $0x8] sm:$0xff]
  %v162 = vld [vmem:[%s159 + $0x10] sm:$0xff]
  %v163 = vld [vmem:[%s159 + $0x18] sm:$0xff]
  %165 = vset.pattern.permute.xlu0 0
  %166 = vperm.xlu0 %165, %v160
  %v167 = vpop.permute.xlu0 %166
  %170 = vset.pattern.permute.xlu0 0
  %171 = vperm.xlu0 %170, %v161
  %v172 = vpop.permute.xlu0 %171
  %175 = vset.pattern.permute.xlu0 0
  %176 = vperm.xlu0 %175, %v162
  %v177 = vpop.permute.xlu0 %176
  %180 = vset.pattern.permute.xlu0 0
  %181 = vperm.xlu0 %180, %v163
  %v182 = vpop.permute.xlu0 %181
  %vm184 = vcmask 261120
  %v186 = vsel %vm184, %v155, 0
  %v189 = vsel %vm184, %v156, 0
  %v192 = vsel %vm184, %v157, 0
  %v195 = vsel %vm184, %v158, 0
  %197 = vmatprep.subr.mxu0 0.0
  %198 = vmatpush1.msra.mxu0 %v146
  %199 = vmatprep.subr.mxu0 0.0
  %200 = vmatpush1.msra.mxu0 %v147
  %201 = vmatprep.subr.mxu0 0.0
  %202 = vmatpush1.msra.mxu0 %v148
  %203 = vmatprep.subr.mxu0 0.0
  %204 = vmatpush1.msra.mxu0 %v149
  %205 = vmatprep.subr.mxu0 0.0
  %206 = vmatpush1.msra.mxu0 0.0
  %207 = vmatprep.subr.mxu0 0.0
  %208 = vmatpush1.msra.mxu0 0.0
  %209 = vmatprep.subr.mxu0 0.0
  %210 = vmatpush1.msra.mxu0 0.0
  %211 = vmatprep.subr.mxu0 0.0
  %212 = vmatpush1.msra.mxu0 0.0
  %213 = vmatprep.subr.mxu0 0.0
  %214 = vmatpush1.msra.mxu0 0.0
  %215 = vmatprep.subr.mxu0 0.0
  %216 = vmatpush1.msra.mxu0 0.0
  %217 = vmatprep.subr.mxu0 0.0
  %218 = vmatpush1.msra.mxu0 0.0
  %219 = vmatprep.subr.mxu0 0.0
  %220 = vmatpush1.msra.mxu0 0.0
  %221 = vmatprep.subr.mxu0 0.0
  %222 = vmatpush1.msra.mxu0 0.0
  %223 = vmatprep.subr.mxu0 0.0
  %224 = vmatpush1.msra.mxu0 0.0
  %225 = vmatprep.subr.mxu0 0.0
  %226 = vmatpush1.msra.mxu0 0.0
  %227 = vmatprep.subr.mxu0 0.0
  %228 = vmatpush1.msra.mxu0 0.0
  %229 = vmatprep.subr.mxu0 0.0
  %230 = vmatpush1.msra.mxu0 0.0
  %231 = vmatprep.subr.mxu0 0.0
  %232 = vmatpush1.msra.mxu0 0.0
  %233 = vmatprep.subr.mxu0 0.0
  %234 = vmatpush1.msra.mxu0 0.0
  %235 = vmatprep.subr.mxu0 0.0
  %236 = vmatpush1.msra.mxu0 0.0
  %237 = vmatprep.subr.mxu0 0.0
  %238 = vmatpush1.msra.mxu0 0.0
  %239 = vmatprep.subr.mxu0 0.0
  %240 = vmatpush1.msra.mxu0 0.0
  %241 = vmatprep.subr.mxu0 0.0
  %242 = vmatpush1.msra.mxu0 0.0
  %243 = vmatprep.subr.mxu0 0.0
  %244 = vmatpush1.msra.mxu0 0.0
  %245 = vmatprep.subr.mxu0 0.0
  %246 = vmatpush1.msra.mxu0 0.0
  %247 = vmatprep.subr.mxu0 0.0
  %248 = vmatpush1.msra.mxu0 0.0
  %249 = vmatprep.subr.mxu0 0.0
  %250 = vmatpush1.msra.mxu0 0.0
  %251 = vmatprep.subr.mxu0 0.0
  %252 = vmatpush1.msra.mxu0 0.0
  %253 = vmatprep.subr.mxu0 0.0
  %254 = vmatpush1.msra.mxu0 0.0
  %255 = vmatprep.subr.mxu0 0.0
  %256 = vmatpush1.msra.mxu0 0.0
  %257 = vmatprep.subr.mxu0 0.0
  %258 = vmatpush1.msra.mxu0 0.0
  %259 = vmatprep.subr.mxu0 0.0
  %260 = vmatpush1.msra.mxu0 0.0
  %261 = vmatprep.mubr.f32.mxu0 0.0
  %262 = vmatmul.mubr.f32.gmra.mrb[0].mxu0 %v186
  %v263 = vpop.f32.mrb[0].mxu0
  %v264 = vadd.f32 %v167, %v263
  %v265 = vpop.f32.mrb[0].mxu0
  %266 = vmatprep.mubr.f32.mxu0 0.0
  %267 = vmatmul.mubr.f32.gmra.mrb[0].mxu0 %v189
  %v268 = vpop.f32.mrb[0].mxu0
  %v269 = vadd.f32 %v172, %v268
  %v270 = vpop.f32.mrb[0].mxu0
  %271 = vmatprep.mubr.f32.mxu0 0.0
  %272 = vmatmul.mubr.f32.gmra.mrb[0].mxu0 %v192
  %v273 = vpop.f32.mrb[0].mxu0
  %v274 = vadd.f32 %v177, %v273
  %v275 = vpop.f32.mrb[0].mxu0
  %276 = vmatprep.mubr.f32.mxu0 0.0
  %277 = vmatmul.mubr.f32.gmra.mrb[0].mxu0 %v195
  %v278 = vpop.f32.mrb[0].mxu0
  %v279 = vadd.f32 %v182, %v278
  %v280 = vpop.f32.mrb[0].mxu0
  %281 = vdwg.mxu0
  %v282 = vmul.f32 %v264, 0.01
  %v283 = vmul.f32 %v269, 0.01
  %v284 = vmul.f32 %v274, 0.01
  %v285 = vmul.f32 %v279, 0.01
  %v286 = vmax.f32 %v264, %v282
  %v287 = vmax.f32 %v269, %v283
  %v288 = vmax.f32 %v274, %v284
  %v289 = vmax.f32 %v279, %v285
  %v290 = vtanh.pop %v286
  %v291 = vtanh.pop %v287
  %v292 = vtanh.pop %v288
  %v293 = vtanh.pop %v289
  %295 = vset.pattern.permute.xlu0 0
  %296 = vperm.xlu0 %295, %v153
  %v297 = vpop.permute.xlu0 %296
  %v300 = vsel %vm184, %v151, 0
  %302 = vmatprep.subr.mxu0 0.0
  %303 = vmatpush1.msra.mxu0 %v290
  %304 = vmatprep.subr.mxu0 0.0
  %305 = vmatpush1.msra.mxu0 %v291
  %306 = vmatprep.subr.mxu0 0.0
  %307 = vmatpush1.msra.mxu0 %v292
  %308 = vmatprep.subr.mxu0 0.0
  %309 = vmatpush1.msra.mxu0 %v293
  %310 = vmatprep.subr.mxu0 0.0
  %311 = vmatpush1.msra.mxu0 0.0
  %312 = vmatprep.subr.mxu0 0.0
  %313 = vmatpush1.msra.mxu0 0.0
  %314 = vmatprep.subr.mxu0 0.0
  %315 = vmatpush1.msra.mxu0 0.0
  %316 = vmatprep.subr.mxu0 0.0
  %317 = vmatpush1.msra.mxu0 0.0
  %318 = vmatprep.subr.mxu0 0.0
  %319 = vmatpush1.msra.mxu0 0.0
  %320 = vmatprep.subr.mxu0 0.0
  %321 = vmatpush1.msra.mxu0 0.0
  %322 = vmatprep.subr.mxu0 0.0
  %323 = vmatpush1.msra.mxu0 0.0
  %324 = vmatprep.subr.mxu0 0.0
  %325 = vmatpush1.msra.mxu0 0.0
  %326 = vmatprep.subr.mxu0 0.0
  %327 = vmatpush1.msra.mxu0 0.0
  %328 = vmatprep.subr.mxu0 0.0
  %329 = vmatpush1.msra.mxu0 0.0
  %330 = vmatprep.subr.mxu0 0.0
  %331 = vmatpush1.msra.mxu0 0.0
  %332 = vmatprep.subr.mxu0 0.0
  %333 = vmatpush1.msra.mxu0 0.0
  %334 = vmatprep.subr.mxu0 0.0
  %335 = vmatpush1.msra.mxu0 0.0
  %336 = vmatprep.subr.mxu0 0.0
  %337 = vmatpush1.msra.mxu0 0.0
  %338 = vmatprep.subr.mxu0 0.0
  %339 = vmatpush1.msra.mxu0 0.0
  %340 = vmatprep.subr.mxu0 0.0
  %341 = vmatpush1.msra.mxu0 0.0
  %342 = vmatprep.subr.mxu0 0.0
  %343 = vmatpush1.msra.mxu0 0.0
  %344 = vmatprep.subr.mxu0 0.0
  %345 = vmatpush1.msra.mxu0 0.0
  %346 = vmatprep.subr.mxu0 0.0
  %347 = vmatpush1.msra.mxu0 0.0
  %348 = vmatprep.subr.mxu0 0.0
  %349 = vmatpush1.msra.mxu0 0.0
  %350 = vmatprep.subr.mxu0 0.0
  %351 = vmatpush1.msra.mxu0 0.0
  %352 = vmatprep.subr.mxu0 0.0
  %353 = vmatpush1.msra.mxu0 0.0
  %354 = vmatprep.subr.mxu0 0.0
  %355 = vmatpush1.msra.mxu0 0.0
  %356 = vmatprep.subr.mxu0 0.0
  %357 = vmatpush1.msra.mxu0 0.0
  %358 = vmatprep.subr.mxu0 0.0
  %359 = vmatpush1.msra.mxu0 0.0
  %360 = vmatprep.subr.mxu0 0.0
  %361 = vmatpush1.msra.mxu0 0.0
  %362 = vmatprep.subr.mxu0 0.0
  %363 = vmatpush1.msra.mxu0 0.0
  %364 = vmatprep.subr.mxu0 0.0
  %365 = vmatpush1.msra.mxu0 0.0
  %366 = vmatprep.mubr.f32.mxu0 0.0
  %367 = vmatmul.mubr.f32.gmra.mrb[0].mxu0 %v300
  %v368 = vpop.f32.mrb[0].mxu0
  %v369 = vadd.f32 %v297, %v368
  %v370 = vpop.f32.mrb[0].mxu0
  %371 = vdwg.mxu0
  %372 = vst [vmem:[%s3] sm:$0x3] %v369
  // Predicated region
  $region14: #{_forward_impl.1} parent=0 // pred_check
    _
  $region15: #{_forward_impl.1} parent=0 // pred_check_branch
    %374 = sbr.rel (0) target = $region17
  $region16: #{_forward_impl.1} parent=0 // pred_region
    _
  $region17: #{_forward_impl.1} parent=0 // pred_fallthru
    _
  // Predicated region
  $region18: #{_forward_impl.1} parent=0 // pred_check
    _
  $region19: #{_forward_impl.1} parent=0 // pred_check_branch
    %376 = sbr.rel (0) target = $region21
  $region20: #{_forward_impl.1} parent=0 // pred_region
    _
  $region21: #{_forward_impl.1} parent=0 // pred_fallthru
    _

</llo_original>
